<compile_context>
chip_gen: v5e
topology: v5e:2x2
jax: 0.10.0
libtpu: 0.0.40
codegen_flags: <defaults>
</compile_context>

<pallas_src>
import functools

import jax
import jax.numpy as jnp
from jax.experimental import pallas as pl
from jax.experimental.pallas import tpu as pltpu

_MIB = 1024 * 1024


def _round_up(x, m):
    return ((x + m - 1) // m) * m


def gsl_unit_kernel(adj_row_ref, adj_col_ref, s1_ref, s2_ref, out_ref, e_ref, *,
                    alphaelu=1.0):
    """One (row-tile i, K-tile k) grid step.

    out_ref : (bm, N_pad) f32 output row-slab; block index depends only on i,
              so it stays VMEM-resident across k and doubles as the adj@adj
              accumulator.  The epilogue overwrites it in place with pij.
    e_ref   : (bm, N_pad) f32 VMEM scratch; each k step fills its (bm, bk)
              column chunk with exp(-elu(s1+s2)) so the EUP work overlaps the
              MXU matmul instead of serializing after the last k step.
    """
    k = pl.program_id(1)
    bk = s2_ref.shape[1]

    @pl.when(k == 0)
    def _init():
        out_ref[...] = jnp.zeros_like(out_ref)

    # adj2 row-slab accumulation: bf16 operands, f32 accumulate (MXU-native).
    out_ref[...] += jnp.dot(adj_row_ref[...], adj_col_ref[...],
                            preferred_element_type=jnp.float32)

    # Per-chunk scores: a @ [h_i ; h_j] == s1[i] + s2[j] (hoisted to wrapper).
    # VPU + EUP work that hides under the matmul above.
    logits = s1_ref[...] + s2_ref[...]                       # (bm, bk)
    t = jnp.exp(jnp.minimum(logits, 0.0))                    # single EUP exp
    elu = jnp.where(logits > 0.0, logits, alphaelu * (t - 1.0))
    col0 = pl.multiple_of(k * bk, bk)
    e_ref[:, pl.ds(col0, bk)] = jnp.exp(-elu)

    @pl.when(k == pl.num_programs(1) - 1)
    def _epilogue():
        adj2 = out_ref[...]                                  # (bm, N_pad)
        # F.normalize(adj2, dim=1) of the original is only a nonzero mask:
        # positive row-scaling never changes the pattern -> mask on adj2.
        edge_e = jnp.where(adj2 != 0.0, e_ref[...], 0.0)
        # TODO(synk): dropout on edge_e is identity here (eval mode only).
        rowsum = jnp.sum(edge_e, axis=1, keepdims=True) + 1e-25
        # One reciprocal per row + N^2 multiplies instead of N^2 divides.
        out_ref[...] = edge_e * pl.reciprocal(rowsum, approx=False)


def _vmem_capacity_bytes():
    try:
        info = pltpu.get_tpu_info()
        cap = getattr(info, "vmem_capacity_bytes", None)
        if cap:
            return int(cap)
    except Exception:
        pass
    return 64 * _MIB  # conservative fallback (v7x per-TC)


def _pow2_tile(pref, cap):
    """Largest 128 * 2^j <= min(pref, cap)."""
    t = 128
    while t * 2 <= min(pref, cap):
        t *= 2
    return t


def _vmem_footprint(bm, bk, n_pad):
    """Conservative per-core VMEM bytes for the chosen tiling."""
    return (2 * bm * n_pad * 4        # f32 output row-slab (double-buffered)
            + bm * n_pad * 4          # f32 e scratch
            + 2 * bk * n_pad * 2      # bf16 adj column slab (double-buffered)
            + 2 * bm * bk * 2         # bf16 adj row tile (double-buffered)
            + 4 * (bm + bk) * 4)      # s1 / s2 score buffers (negligible)


def gsl_unit_forward(x, w, a, adj, *, bm=None, bk=None, alphaelu=1.0):
    n, f_in = x.shape
    f_out = w.shape[1]

    x = x.astype(jnp.float32)
    w = w.astype(jnp.float32)
    a = a.astype(jnp.float32)

    # Hoist attention-vector algebra out of the kernel:
    #   s1[i] = (x @ W) @ a_left = x @ (W @ a_left); s2 analogous.
    v1 = w @ a[0, :f_out]                        # (f_in,)
    v2 = w @ a[0, f_out:]                        # (f_in,)
    s1 = (x @ v1)[:, None]                       # (N, 1)
    s2 = (x @ v2)[None, :]                       # (1, N)

    # ---- generation-aware tile / VMEM selection -----------------------------
    vmem_cap = _vmem_capacity_bytes()
    vmem_limit = max(vmem_cap - 8 * _MIB, 32 * _MIB)
    tile_budget = vmem_limit - 2 * _MIB

    n_pad0 = _round_up(n, 128)
    if bm is None or bk is None:
        if vmem_cap >= 100 * _MIB:               # v5e / v6e: 128 MiB VMEM
            bm_pref, bk_pref = (bm or 512), (bk or 1024)
        else:                                    # v7x: 64 MiB per TC
            bm_pref, bk_pref = (bm or 512), (bk or 512)
    else:
        bm_pref, bk_pref = bm, bk

    # Power-of-two x 128 tiles -> lcm(bm, bk) == max(bm, bk): padded N is at
    # most one tile larger than N (removes the old lcm padding cliff).
    bm = _pow2_tile(bm_pref, n_pad0)
    bk = _pow2_tile(bk_pref, n_pad0)
    n_pad = _round_up(n_pad0, max(bm, bk))

    # Large-N fallback: shrink until the VMEM-resident slabs fit.  bk first
    # (it only amortizes accumulator RMW + per-step overhead); keep bm — the
    # flops/byte lever on the streamed (bk, N) column slab — as big as we can.
    while _vmem_footprint(bm, bk, n_pad) > tile_budget and (bm > 128 or bk > 128):
        if bk > 128:
            bk //= 2
        else:
            bm //= 2
        n_pad = _round_up(n_pad0, max(bm, bk))

    pad = n_pad - n
    # Cast BEFORE padding: never materialize an N^2 f32 intermediate.
    # bf16 is exact for 0/1 adjacency; padded rows/cols are zero so they never
    # survive the adj2 != 0 mask, padded rows normalize to zero and are sliced.
    adj_bf16 = jnp.pad(adj.astype(jnp.bfloat16), ((0, pad), (0, pad)))
    s1_p = jnp.pad(s1, ((0, pad), (0, 0)))
    s2_p = jnp.pad(s2, ((0, 0), (0, pad)))

    kernel = functools.partial(gsl_unit_kernel, alphaelu=alphaelu)

    grid = (n_pad // bm, n_pad // bk)
    cost = pl.CostEstimate(
        flops=2 * n_pad**3 + 12 * n_pad**2,
        transcendentals=2 * n_pad**2,
        bytes_accessed=(n_pad * n_pad * 2                      # adj row tiles (once)
                        + (n_pad // bm) * n_pad * n_pad * 2    # col-slab re-reads
                        + n_pad * n_pad * 4                    # output writeback
                        + (n_pad // bm + n_pad // bk) * n_pad * 4),  # s1/s2
    )

    out = pl.pallas_call(
        kernel,
        out_shape=jax.ShapeDtypeStruct((n_pad, n_pad), jnp.float32),
        grid=grid,
        in_specs=[
            pl.BlockSpec((bm, bk), lambda i, k: (i, k)),       # adj row tile
            pl.BlockSpec((bk, n_pad), lambda i, k: (k, 0)),    # adj column slab
            pl.BlockSpec((bm, 1), lambda i, k: (i, 0)),        # s1 row scores
            pl.BlockSpec((1, bk), lambda i, k: (0, k)),        # s2 col scores
        ],
        out_specs=pl.BlockSpec((bm, n_pad), lambda i, k: (i, 0)),
        scratch_shapes=[pltpu.VMEM((bm, n_pad), jnp.float32)],
        compiler_params=pltpu.CompilerParams(
            dimension_semantics=("parallel", "arbitrary"),
            vmem_limit_bytes=int(vmem_limit),
        ),
        cost_estimate=cost,
    )(adj_bf16, adj_bf16, s1_p, s2_p)

    return out[:n, :n]


def gsl_unit_ref(x, w, a, adj):
    """Pure-JAX reference mirroring the PyTorch forward (eval mode)."""
    f_out = w.shape[1]
    adj2 = adj @ adj
    norm = jnp.sqrt(jnp.sum(adj2 * adj2, axis=1, keepdims=True))
    adj2n = adj2 / jnp.maximum(norm, 1e-12)
    h = x @ w
    s1 = h @ a[0, :f_out]
    s2 = h @ a[0, f_out:]
    logits = s1[:, None] + s2[None, :]
    elu = jnp.where(logits > 0, logits, jnp.exp(logits) - 1.0)
    e_all = jnp.exp(-elu)
    edge_e = jnp.where(adj2n != 0.0, e_all, 0.0)
    e_rowsum = jnp.sum(edge_e, axis=1, keepdims=True) + 1e-25
    return edge_e / e_rowsum


if __name__ == "__main__":
    key = jax.random.PRNGKey(0)
    f_in, f_out = 8, 8

    k_w, k_a, k_x, k_adj, k_x2, k_adj2 = jax.random.split(key, 6)

    # nn.init.xavier_normal_(gain=1.414): std = gain * sqrt(2 / (fan_in + fan_out))
    w_std = 1.414 * (2.0 / (f_in + f_out)) ** 0.5
    a_std = 1.414 * (2.0 / (1 + 2 * f_out)) ** 0.5
    W = jax.random.normal(k_w, (f_in, f_out), jnp.float32) * w_std
    a = jax.random.normal(k_a, (1, 2 * f_out), jnp.float32) * a_std

    # Small case (auto tiles, single grid step).
    N = 16
    x = jax.random.normal(k_x, (N, f_in), jnp.float32)
    adj = (jax.random.uniform(k_adj, (N, N)) < 0.35).astype(jnp.float32)
    out = jax.block_until_ready(gsl_unit_forward(x, W, a, adj))
    ref = gsl_unit_ref(x, W, a, adj)
    assert out.shape == (N, N)
    assert bool(jnp.allclose(out, ref, rtol=1e-4, atol=1e-6)), "mismatch (N=16)"

    # Multi-tile case: forces grid (2, 2) so the K-loop accumulation, chunked
    # e-scratch writes, padding and epilogue paths are all exercised.
    N2 = 200
    x2 = jax.random.normal(k_x2, (N2, f_in), jnp.float32)
    adj2 = (jax.random.uniform(k_adj2, (N2, N2)) < 0.1).astype(jnp.float32)
    out2 = jax.block_until_ready(gsl_unit_forward(x2, W, a, adj2, bm=128, bk=128))
    ref2 = gsl_unit_ref(x2, W, a, adj2)
    assert out2.shape == (N2, N2)
    assert bool(jnp.allclose(out2, ref2, rtol=1e-4, atol=1e-6)), "mismatch (N=200)"

    print("KERNEL_OK")
</pallas_src>

<mosaic_0001>
module attributes {stable_mosaic.version = 11 : i64} {
  func.func @gsl_unit_kernel(%arg0: i32, %arg1: i32, %arg2: memref<128x128xbf16, #tpu.memory_space<vmem>>, %arg3: memref<128x128xbf16, #tpu.memory_space<vmem>>, %arg4: memref<128x1xf32, #tpu.memory_space<vmem>>, %arg5: memref<1x128xf32, #tpu.memory_space<vmem>>, %arg6: memref<128x128xf32, #tpu.memory_space<vmem>>, %arg7: memref<128x128xf32, #tpu.memory_space<vmem>>) attributes {dimension_semantics = [#tpu.dimension_semantics<parallel>, #tpu.dimension_semantics<arbitrary>], iteration_bounds = array<i64: 1, 1>, scalar_prefetch = 0 : i64, scratch_operands = 1 : i64, tpu.core_type = #tpu.core_type<tc>, window_params = [{transform_indices = @transform_0, window_bounds = array<i64: 128, 128>}, {transform_indices = @transform_1, window_bounds = array<i64: 128, 128>}, {transform_indices = @transform_2, window_bounds = array<i64: 128, 1>}, {transform_indices = @transform_3, window_bounds = array<i64: 1, 128>}, {transform_indices = @transform_4, window_bounds = array<i64: 128, 128>}]} {
    %c0_i32 = arith.constant 0 : i32
    %0 = arith.cmpi eq, %arg1, %c0_i32 : i32
    %1 = arith.extui %0 : i1 to i32
    %c0_i32_0 = arith.constant 0 : i32
    %2 = arith.cmpi ne, %1, %c0_i32_0 : i32
    scf.if %2 {
      %cst_20 = arith.constant 0.000000e+00 : f32
      %34 = vector.broadcast %cst_20 : f32 to vector<128x128xf32>
      %c0_21 = arith.constant 0 : index
      %c0_22 = arith.constant 0 : index
      %35 = vector.load %arg6[%c0_21, %c0_22] : memref<128x128xf32, #tpu.memory_space<vmem>>, vector<128x128xf32>
      tpu.vector_store %arg6[%c0_21, %c0_22], %34 {strides = array<i32>} : memref<128x128xf32, #tpu.memory_space<vmem>>, vector<128x128xf32>,
    } else {
    }
    %c0 = arith.constant 0 : index
    %c0_1 = arith.constant 0 : index
    %3 = vector.load %arg6[%c0, %c0_1] : memref<128x128xf32, #tpu.memory_space<vmem>>, vector<128x128xf32>
    %c0_2 = arith.constant 0 : index
    %c0_3 = arith.constant 0 : index
    %4 = vector.load %arg2[%c0_2, %c0_3] : memref<128x128xbf16, #tpu.memory_space<vmem>>, vector<128x128xbf16>
    %c0_4 = arith.constant 0 : index
    %c0_5 = arith.constant 0 : index
    %5 = vector.load %arg3[%c0_4, %c0_5] : memref<128x128xbf16, #tpu.memory_space<vmem>>, vector<128x128xbf16>
    %cst = arith.constant dense<0.000000e+00> : vector<128x128xf32>
    %6 = tpu.matmul %4, %5, %cst {dimension_numbers = #tpu.dot_dimension_numbers<[1], [0], [0], [1], [0, 0, 1, 1], [], []>} : vector<128x128xbf16>, vector<128x128xbf16>, vector<128x128xf32> -> vector<128x128xf32>
    %7 = arith.addf %3, %6 : vector<128x128xf32>
    %c0_6 = arith.constant 0 : index
    %c0_7 = arith.constant 0 : index
    %8 = vector.load %arg6[%c0_6, %c0_7] : memref<128x128xf32, #tpu.memory_space<vmem>>, vector<128x128xf32>
    tpu.vector_store %arg6[%c0_6, %c0_7], %7 {strides = array<i32>} : memref<128x128xf32, #tpu.memory_space<vmem>>, vector<128x128xf32>,
    %c0_8 = arith.constant 0 : index
    %c0_9 = arith.constant 0 : index
    %9 = vector.load %arg4[%c0_8, %c0_9] : memref<128x1xf32, #tpu.memory_space<vmem>>, vector<128x1xf32>
    %c0_10 = arith.constant 0 : index
    %c0_11 = arith.constant 0 : index
    %10 = vector.load %arg5[%c0_10, %c0_11] : memref<1x128xf32, #tpu.memory_space<vmem>>, vector<1x128xf32>
    %11 = vector.broadcast %9 : vector<128x1xf32> to vector<128x128xf32>
    %12 = vector.broadcast %10 : vector<1x128xf32> to vector<128x128xf32>
    %13 = arith.addf %11, %12 : vector<128x128xf32>
    %cst_12 = arith.constant 0.000000e+00 : f32
    %14 = vector.broadcast %cst_12 : f32 to vector<128x128xf32>
    %15 = arith.minimumf %13, %14 : vector<128x128xf32>
    %16 = math.exp %15 : vector<128x128xf32>
    %cst_13 = arith.constant 0.000000e+00 : f32
    %17 = vector.broadcast %cst_13 : f32 to vector<128x128xf32>
    %18 = arith.cmpf ogt, %13, %17 : vector<128x128xf32>
    %cst_14 = arith.constant 1.000000e+00 : f32
    %19 = vector.broadcast %cst_14 : f32 to vector<128x128xf32>
    %20 = arith.subf %16, %19 : vector<128x128xf32>
    %cst_15 = arith.constant 1.000000e+00 : f32
    %21 = vector.broadcast %cst_15 : f32 to vector<128x128xf32>
    %22 = arith.mulf %21, %20 : vector<128x128xf32>
    %23 = arith.select %18, %13, %22 : vector<128x128xi1>, vector<128x128xf32>
    %c128_i32 = arith.constant 128 : i32
    %24 = arith.muli %arg1, %c128_i32 : i32
    %25 = tpu.assume_multiple %24, 128 : i32
    %cst_16 = arith.constant 0.000000e+00 : f32
    %26 = vector.broadcast %cst_16 : f32 to vector<128x128xf32>
    %27 = arith.subf %26, %23 : vector<128x128xf32>
    %28 = math.exp %27 : vector<128x128xf32>
    %c0_17 = arith.constant 0 : index
    %29 = arith.index_cast %25 : i32 to index
    %30 = vector.load %arg7[%c0_17, %29] : memref<128x128xf32, #tpu.memory_space<vmem>>, vector<128x128xf32>
    tpu.vector_store %arg7[%c0_17, %29], %28 {strides = array<i32>} : memref<128x128xf32, #tpu.memory_space<vmem>>, vector<128x128xf32>,
    %c0_i32_18 = arith.constant 0 : i32
    %31 = arith.cmpi eq, %arg1, %c0_i32_18 : i32
    %32 = arith.extui %31 : i1 to i32
    %c0_i32_19 = arith.constant 0 : i32
    %33 = arith.cmpi ne, %32, %c0_i32_19 : i32
    scf.if %33 {
      %c0_20 = arith.constant 0 : index
      %c0_21 = arith.constant 0 : index
      %34 = vector.load %arg6[%c0_20, %c0_21] : memref<128x128xf32, #tpu.memory_space<vmem>>, vector<128x128xf32>
      %cst_22 = arith.constant 0.000000e+00 : f32
      %35 = vector.broadcast %cst_22 : f32 to vector<128x128xf32>
      %36 = arith.cmpf one, %34, %35 : vector<128x128xf32>
      %c0_23 = arith.constant 0 : index
      %c0_24 = arith.constant 0 : index
      %37 = vector.load %arg7[%c0_23, %c0_24] : memref<128x128xf32, #tpu.memory_space<vmem>>, vector<128x128xf32>
      %cst_25 = arith.constant 0.000000e+00 : f32
      %38 = vector.broadcast %cst_25 : f32 to vector<128x128xf32>
      %39 = arith.select %36, %37, %38 : vector<128x128xi1>, vector<128x128xf32>
      %cst_26 = arith.constant dense<0.000000e+00> : vector<128xf32>
      %40 = vector.multi_reduction <add>, %39, %cst_26 [1] : vector<128x128xf32> to vector<128xf32>
      %41 = vector.shape_cast %40 : vector<128xf32> to vector<128x1xf32>
      %cst_27 = arith.constant 1.000000e-25 : f32
      %42 = vector.broadcast %cst_27 : f32 to vector<128x1xf32>
      %43 = arith.addf %41, %42 : vector<128x1xf32>
      %44 = tpu.reciprocal %43 : vector<128x1xf32> -> vector<128x1xf32>
      %45 = vector.broadcast %44 : vector<128x1xf32> to vector<128x128xf32>
      %46 = arith.mulf %39, %45 : vector<128x128xf32>
      %c0_28 = arith.constant 0 : index
      %c0_29 = arith.constant 0 : index
      %47 = vector.load %arg6[%c0_28, %c0_29] : memref<128x128xf32, #tpu.memory_space<vmem>>, vector<128x128xf32>
      tpu.vector_store %arg6[%c0_28, %c0_29], %46 {strides = array<i32>} : memref<128x128xf32, #tpu.memory_space<vmem>>, vector<128x128xf32>,
    } else {
    }
    return
  }
  func.func @transform_0(%arg0: i32, %arg1: i32) -> (i32, i32) {
    %c0_i32 = arith.constant 0 : i32
    return %arg0, %arg1 : i32, i32
  }
  func.func @transform_1(%arg0: i32, %arg1: i32) -> (i32, i32) {
    %c0_i32 = arith.constant 0 : i32
    %c0_i32_0 = arith.constant 0 : i32
    return %arg1, %c0_i32 : i32, i32
  }
  func.func @transform_2(%arg0: i32, %arg1: i32) -> (i32, i32) {
    %c0_i32 = arith.constant 0 : i32
    %c0_i32_0 = arith.constant 0 : i32
    return %arg0, %c0_i32 : i32, i32
  }
  func.func @transform_3(%arg0: i32, %arg1: i32) -> (i32, i32) {
    %c0_i32 = arith.constant 0 : i32
    %c0_i32_0 = arith.constant 0 : i32
    return %c0_i32, %arg1 : i32, i32
  }
  func.func @transform_4(%arg0: i32, %arg1: i32) -> (i32, i32) {
    %c0_i32 = arith.constant 0 : i32
    %c0_i32_0 = arith.constant 0 : i32
    return %arg0, %c0_i32 : i32, i32
  }
}

</mosaic_0001>

<llo_original>
// kernel: tpu_custom_call.1
$region0: #{tpu_custom_call.1}
  #allocation0 [shape = 'u32[]', space=smem, size = 0x4, offset = 0x4, fixed_abs, tag = 'smem constant byte address 0x4 - core index']
  #allocation1 [shape = 'u32[72,128]{1,0:T(1,128)}', space=vmem, size = 0x9000, scoped, tag = 'internal scratch']
  #allocation2 [shape = 'f32[128,128]{1,0:T(8,128)}', space=vmem, size = 0x10000, scoped, tag = 'scratch operand']
  %s0 = inlined_call_operand.vmem [shape: bf16[128,128], index: 0, kind: input, shape index: {}]
  %s1 = inlined_call_operand.vmem [shape: bf16[128,128], index: 1, kind: input, shape index: {}]
  %s2 = inlined_call_operand.vmem [shape: f32[128,1], index: 2, kind: input, shape index: {}]
  %s3 = inlined_call_operand.vmem [shape: f32[1,128], index: 3, kind: input, shape index: {}]
  %s4 = inlined_call_operand.hbm [shape: f32[128,128], index: 4, kind: output, shape index: {}]
  %s5 = sld [smem:[#allocation0]]
  $region34: #{tpu_custom_call.1} parent=0
    _
  %s7 = ssub.s32 1, %s5
  %s8 = scalar_select 0, %s7, %s5
  $region1: #{tpu_custom_call.1} parent=0
    #allocation3 [shape = 'u8[65536]{0}', space=vmem, size = 0x10000, scoped, tag = 'output window, operand 0, single buffered']
    #allocation4 [shape = 's32[1]{0}', space=sflag, size = 0x4, scoped, tag = 'scoped memory for tpu_custom_call.1']
    %9 = vsyncpa [#allocation4], 0
    // Predicated region
    $region2: #{tpu_custom_call.1} parent=1 // pred_check
      _
    $region3: #{tpu_custom_call.1} parent=1 // pred_check_branch
      %11 = sbr.rel (0) target = $region5
    $region4: #{tpu_custom_call.1} parent=1 // pred_region
      _
    $region5: #{tpu_custom_call.1} parent=1 // pred_fallthru
      _
    // Predicated region
    $region6: #{tpu_custom_call.1} parent=1 // pred_check
      _
    $region7: #{tpu_custom_call.1} parent=1 // pred_check_branch
      %13 = sbr.rel (0) target = $region9
    $region8: #{tpu_custom_call.1} parent=1 // pred_region
      _
    $region9: #{tpu_custom_call.1} parent=1 // pred_fallthru
      _
    // Predicated region
    $region10: #{tpu_custom_call.1} parent=1 // pred_check
      _
    $region11: #{tpu_custom_call.1} parent=1 // pred_check_branch
      %15 = sbr.rel (0) target = $region13
    $region12: #{tpu_custom_call.1} parent=1 // pred_region
      _
    $region13: #{tpu_custom_call.1} parent=1 // pred_fallthru
      _
    // Predicated region
    $region14: #{tpu_custom_call.1} parent=1 // pred_check
      _
    $region15: #{tpu_custom_call.1} parent=1 // pred_check_branch
      %17 = sbr.rel (0) target = $region17
    $region16: #{tpu_custom_call.1} parent=1 // pred_region
      _
    $region17: #{tpu_custom_call.1} parent=1 // pred_fallthru
      _
    %p18 = scmp.eq.s32.totalorder 0, 0
    // Predicated region
    $region18: #{tpu_custom_call.1} parent=1 // pred_check
      %p19 = pneg %p18
    $region19: #{tpu_custom_call.1} parent=1 // pred_check_branch
      %21 = sbr.rel (%p19) target = $region21
    $region20: #{tpu_custom_call.1} parent=1 // pred_region
      %22 = vst [vmem:[#allocation3] sm:$0xff] 0.0
      %23 = vst [vmem:[#allocation3 + $0x8] sm:$0xff] 0.0
      %24 = vst [vmem:[#allocation3 + $0x10] sm:$0xff] 0.0
      %25 = vst [vmem:[#allocation3 + $0x18] sm:$0xff] 0.0
      %26 = vst [vmem:[#allocation3 + $0x20] sm:$0xff] 0.0
      %27 = vst [vmem:[#allocation3 + $0x28] sm:$0xff] 0.0
      %28 = vst [vmem:[#allocation3 + $0x30] sm:$0xff] 0.0
      %29 = vst [vmem:[#allocation3 + $0x38] sm:$0xff] 0.0
      %30 = vst [vmem:[#allocation3 + $0x40] sm:$0xff] 0.0
      %31 = vst [vmem:[#allocation3 + $0x48] sm:$0xff] 0.0
      %32 = vst [vmem:[#allocation3 + $0x50] sm:$0xff] 0.0
      %33 = vst [vmem:[#allocation3 + $0x58] sm:$0xff] 0.0
      %34 = vst [vmem:[#allocation3 + $0x60] sm:$0xff] 0.0
      %35 = vst [vmem:[#allocation3 + $0x68] sm:$0xff] 0.0
      %36 = vst [vmem:[#allocation3 + $0x70] sm:$0xff] 0.0
      %37 = vst [vmem:[#allocation3 + $0x78] sm:$0xff] 0.0
    $region21: #{tpu_custom_call.1} parent=1 // pred_fallthru
      _
    %v38 = vld [vmem:[#allocation3] sm:$0xff]
    %v39 = vld [vmem:[#allocation3 + $0x8] sm:$0xff]
    %v40 = vld [vmem:[#allocation3 + $0x10] sm:$0xff]
    %v41 = vld [vmem:[#allocation3 + $0x18] sm:$0xff]
    %v42 = vld [vmem:[#allocation3 + $0x20] sm:$0xff]
    %v43 = vld [vmem:[#allocation3 + $0x28] sm:$0xff]
    %v44 = vld [vmem:[#allocation3 + $0x30] sm:$0xff]
    %v45 = vld [vmem:[#allocation3 + $0x38] sm:$0xff]
    %v46 = vld [vmem:[#allocation3 + $0x40] sm:$0xff]
    %v47 = vld [vmem:[#allocation3 + $0x48] sm:$0xff]
    %v48 = vld [vmem:[#allocation3 + $0x50] sm:$0xff]
    %v49 = vld [vmem:[#allocation3 + $0x58] sm:$0xff]
    %v50 = vld [vmem:[#allocation3 + $0x60] sm:$0xff]
    %v51 = vld [vmem:[#allocation3 + $0x68] sm:$0xff]
    %v52 = vld [vmem:[#allocation3 + $0x70] sm:$0xff]
    %v53 = vld [vmem:[#allocation3 + $0x78] sm:$0xff]
    %v54 = vld [vmem:[%s0] sm:$0xf]
    %v55 = vld [vmem:[%s0 + $0x4] sm:$0xf]
    %v56 = vld [vmem:[%s0 + $0x8] sm:$0xf]
    %v57 = vld [vmem:[%s0 + $0xc] sm:$0xf]
    %v58 = vld [vmem:[%s0 + $0x10] sm:$0xf]
    %v59 = vld [vmem:[%s0 + $0x14] sm:$0xf]
    %v60 = vld [vmem:[%s0 + $0x18] sm:$0xf]
    %v61 = vld [vmem:[%s0 + $0x1c] sm:$0xf]
    %v62 = vld [vmem:[%s0 + $0x20] sm:$0xf]
    %v63 = vld [vmem:[%s0 + $0x24] sm:$0xf]
    %v64 = vld [vmem:[%s0 + $0x28] sm:$0xf]
    %v65 = vld [vmem:[%s0 + $0x2c] sm:$0xf]
    %v66 = vld [vmem:[%s0 + $0x30] sm:$0xf]
    %v67 = vld [vmem:[%s0 + $0x34] sm:$0xf]
    %v68 = vld [vmem:[%s0 + $0x38] sm:$0xf]
    %v69 = vld [vmem:[%s0 + $0x3c] sm:$0xf]
    %v70 = vld [vmem:[%s1] sm:$0xf]
    %v71 = vld [vmem:[%s1 + $0x4] sm:$0xf]
    %v72 = vld [vmem:[%s1 + $0x8] sm:$0xf]
    %v73 = vld [vmem:[%s1 + $0xc] sm:$0xf]
    %v74 = vld [vmem:[%s1 + $0x10] sm:$0xf]
    %v75 = vld [vmem:[%s1 + $0x14] sm:$0xf]
    %v76 = vld [vmem:[%s1 + $0x18] sm:$0xf]
    %v77 = vld [vmem:[%s1 + $0x1c] sm:$0xf]
    %v78 = vld [vmem:[%s1 + $0x20] sm:$0xf]
    %v79 = vld [vmem:[%s1 + $0x24] sm:$0xf]
    %v80 = vld [vmem:[%s1 + $0x28] sm:$0xf]
    %v81 = vld [vmem:[%s1 + $0x2c] sm:$0xf]
    %v82 = vld [vmem:[%s1 + $0x30] sm:$0xf]
    %v83 = vld [vmem:[%s1 + $0x34] sm:$0xf]
    %v84 = vld [vmem:[%s1 + $0x38] sm:$0xf]
    %v85 = vld [vmem:[%s1 + $0x3c] sm:$0xf]
    %v102 = vunpack.c.l.b16 %v54
    %v103 = vunpack.c.l.b16 %v55
    %v104 = vunpack.c.l.b16 %v56
    %v105 = vunpack.c.l.b16 %v57
    %v106 = vunpack.c.l.b16 %v58
    %v107 = vunpack.c.l.b16 %v59
    %v108 = vunpack.c.l.b16 %v60
    %v109 = vunpack.c.l.b16 %v61
    %v110 = vunpack.c.l.b16 %v62
    %v111 = vunpack.c.l.b16 %v63
    %v112 = vunpack.c.l.b16 %v64
    %v113 = vunpack.c.l.b16 %v65
    %v114 = vunpack.c.l.b16 %v66
    %v115 = vunpack.c.l.b16 %v67
    %v116 = vunpack.c.l.b16 %v68
    %v117 = vunpack.c.l.b16 %v69
    %v118 = vpack.c.b16 %v103, %v102
    %v119 = vpack.c.b16 %v105, %v104
    %v120 = vpack.c.b16 %v107, %v106
    %v121 = vpack.c.b16 %v109, %v108
    %v122 = vpack.c.b16 %v111, %v110
    %v123 = vpack.c.b16 %v113, %v112
    %v124 = vpack.c.b16 %v115, %v114
    %v125 = vpack.c.b16 %v117, %v116
    %v150 = vunpack.c.l.b16 %v70
    %v151 = vunpack.c.l.b16 %v71
    %v152 = vunpack.c.l.b16 %v72
    %v153 = vunpack.c.l.b16 %v73
    %v154 = vunpack.c.l.b16 %v74
    %v155 = vunpack.c.l.b16 %v75
    %v156 = vunpack.c.l.b16 %v76
    %v157 = vunpack.c.l.b16 %v77
    %v158 = vunpack.c.l.b16 %v78
    %v159 = vunpack.c.l.b16 %v79
    %v160 = vunpack.c.l.b16 %v80
    %v161 = vunpack.c.l.b16 %v81
    %v162 = vunpack.c.l.b16 %v82
    %v163 = vunpack.c.l.b16 %v83
    %v164 = vunpack.c.l.b16 %v84
    %v165 = vunpack.c.l.b16 %v85
    %v166 = vpack.c.b16 %v151, %v150
    %v167 = vpack.c.b16 %v153, %v152
    %v168 = vpack.c.b16 %v155, %v154
    %v169 = vpack.c.b16 %v157, %v156
    %v170 = vpack.c.b16 %v159, %v158
    %v171 = vpack.c.b16 %v161, %v160
    %v172 = vpack.c.b16 %v163, %v162
    %v173 = vpack.c.b16 %v165, %v164
    %182 = vmatpush.bf16.msra.mxu0 %v173
    %183 = vmatpush.bf16.msra.mxu0 %v172
    %184 = vmatpush.bf16.msra.mxu0 %v171
    %185 = vmatpush.bf16.msra.mxu0 %v170
    %186 = vmatpush.bf16.msra.mxu0 %v169
    %187 = vmatpush.bf16.msra.mxu0 %v168
    %188 = vmatpush.bf16.msra.mxu0 %v167
    %189 = vmatpush.bf16.msra.mxu0 %v166
    %190 = vmatmul.bf16.gmra.mxu0 %v118
    %v191 = vpop.f32.mrf.mxu0
    %v192 = vadd.f32 0.0, %v191
    %v193 = vpop.f32.mrf.mxu0
    %v194 = vadd.f32 0.0, %v193
    %195 = vmatmul.bf16.gmra.mxu0 %v119
    %v196 = vpop.f32.mrf.mxu0
    %v197 = vadd.f32 0.0, %v196
    %v198 = vpop.f32.mrf.mxu0
    %v199 = vadd.f32 0.0, %v198
    %200 = vmatmul.bf16.gmra.mxu0 %v120
    %v201 = vpop.f32.mrf.mxu0
    %v202 = vadd.f32 0.0, %v201
    %v203 = vpop.f32.mrf.mxu0
    %v204 = vadd.f32 0.0, %v203
    %205 = vmatmul.bf16.gmra.mxu0 %v121
    %v206 = vpop.f32.mrf.mxu0
    %v207 = vadd.f32 0.0, %v206
    %v208 = vpop.f32.mrf.mxu0
    %v209 = vadd.f32 0.0, %v208
    %210 = vmatmul.bf16.gmra.mxu0 %v122
    %v211 = vpop.f32.mrf.mxu0
    %v212 = vadd.f32 0.0, %v211
    %v213 = vpop.f32.mrf.mxu0
    %v214 = vadd.f32 0.0, %v213
    %215 = vmatmul.bf16.gmra.mxu0 %v123
    %v216 = vpop.f32.mrf.mxu0
    %v217 = vadd.f32 0.0, %v216
    %v218 = vpop.f32.mrf.mxu0
    %v219 = vadd.f32 0.0, %v218
    %220 = vmatmul.bf16.gmra.mxu0 %v124
    %v221 = vpop.f32.mrf.mxu0
    %v222 = vadd.f32 0.0, %v221
    %v223 = vpop.f32.mrf.mxu0
    %v224 = vadd.f32 0.0, %v223
    %225 = vmatmul.bf16.gmra.mxu0 %v125
    %v226 = vpop.f32.mrf.mxu0
    %v227 = vadd.f32 0.0, %v226
    %v228 = vpop.f32.mrf.mxu0
    %v229 = vadd.f32 0.0, %v228
    %230 = vdwg.mxu0
    %v231 = vadd.f32 %v38, %v192
    %v232 = vadd.f32 %v39, %v194
    %v233 = vadd.f32 %v40, %v197
    %v234 = vadd.f32 %v41, %v199
    %v235 = vadd.f32 %v42, %v202
    %v236 = vadd.f32 %v43, %v204
    %v237 = vadd.f32 %v44, %v207
    %v238 = vadd.f32 %v45, %v209
    %v239 = vadd.f32 %v46, %v212
    %v240 = vadd.f32 %v47, %v214
    %v241 = vadd.f32 %v48, %v217
    %v242 = vadd.f32 %v49, %v219
    %v243 = vadd.f32 %v50, %v222
    %v244 = vadd.f32 %v51, %v224
    %v245 = vadd.f32 %v52, %v227
    %v246 = vadd.f32 %v53, %v229
    %247 = vst [vmem:[#allocation3] sm:$0xff] %v231
    %248 = vst [vmem:[#allocation3 + $0x8] sm:$0xff] %v232
    %249 = vst [vmem:[#allocation3 + $0x10] sm:$0xff] %v233
    %250 = vst [vmem:[#allocation3 + $0x18] sm:$0xff] %v234
    %251 = vst [vmem:[#allocation3 + $0x20] sm:$0xff] %v235
    %252 = vst [vmem:[#allocation3 + $0x28] sm:$0xff] %v236
    %253 = vst [vmem:[#allocation3 + $0x30] sm:$0xff] %v237
    %254 = vst [vmem:[#allocation3 + $0x38] sm:$0xff] %v238
    %255 = vst [vmem:[#allocation3 + $0x40] sm:$0xff] %v239
    %256 = vst [vmem:[#allocation3 + $0x48] sm:$0xff] %v240
    %257 = vst [vmem:[#allocation3 + $0x50] sm:$0xff] %v241
    %258 = vst [vmem:[#allocation3 + $0x58] sm:$0xff] %v242
    %259 = vst [vmem:[#allocation3 + $0x60] sm:$0xff] %v243
    %260 = vst [vmem:[#allocation3 + $0x68] sm:$0xff] %v244
    %261 = vst [vmem:[#allocation3 + $0x70] sm:$0xff] %v245
    %262 = vst [vmem:[#allocation3 + $0x78] sm:$0xff] %v246
    %v263 = vld [vmem:[%s2] sm:$0xff]
    %v264 = vld [vmem:[%s2 + $0x8] sm:$0xff]
    %v265 = vld [vmem:[%s2 + $0x10] sm:$0xff]
    %v266 = vld [vmem:[%s2 + $0x18] sm:$0xff]
    %v267 = vld [vmem:[%s2 + $0x20] sm:$0xff]
    %v268 = vld [vmem:[%s2 + $0x28] sm:$0xff]
    %v269 = vld [vmem:[%s2 + $0x30] sm:$0xff]
    %v270 = vld [vmem:[%s2 + $0x38] sm:$0xff]
    %v271 = vld [vmem:[%s2 + $0x40] sm:$0xff]
    %v272 = vld [vmem:[%s2 + $0x48] sm:$0xff]
    %v273 = vld [vmem:[%s2 + $0x50] sm:$0xff]
    %v274 = vld [vmem:[%s2 + $0x58] sm:$0xff]
    %v275 = vld [vmem:[%s2 + $0x60] sm:$0xff]
    %v276 = vld [vmem:[%s2 + $0x68] sm:$0xff]
    %v277 = vld [vmem:[%s2 + $0x70] sm:$0xff]
    %v278 = vld [vmem:[%s2 + $0x78] sm:$0xff]
    %v279 = vld [vmem:[%s3] sm:$0x1]
    %281 = vset.pattern.permute.xlu0 0
    %282 = vperm.xlu0 %281, %v263
    %v283 = vpop.permute.xlu0 %282
    %286 = vset.pattern.permute.xlu0 0
    %287 = vperm.xlu0 %286, %v264
    %v288 = vpop.permute.xlu0 %287
    %291 = vset.pattern.permute.xlu0 0
    %292 = vperm.xlu0 %291, %v265
    %v293 = vpop.permute.xlu0 %292
    %296 = vset.pattern.permute.xlu0 0
    %297 = vperm.xlu0 %296, %v266
    %v298 = vpop.permute.xlu0 %297
    %301 = vset.pattern.permute.xlu0 0
    %302 = vperm.xlu0 %301, %v267
    %v303 = vpop.permute.xlu0 %302
    %306 = vset.pattern.permute.xlu0 0
    %307 = vperm.xlu0 %306, %v268
    %v308 = vpop.permute.xlu0 %307
    %311 = vset.pattern.permute.xlu0 0
    %312 = vperm.xlu0 %311, %v269
    %v313 = vpop.permute.xlu0 %312
    %316 = vset.pattern.permute.xlu0 0
    %317 = vperm.xlu0 %316, %v270
    %v318 = vpop.permute.xlu0 %317
    %321 = vset.pattern.permute.xlu0 0
    %322 = vperm.xlu0 %321, %v271
    %v323 = vpop.permute.xlu0 %322
    %326 = vset.pattern.permute.xlu0 0
    %327 = vperm.xlu0 %326, %v272
    %v328 = vpop.permute.xlu0 %327
    %331 = vset.pattern.permute.xlu0 0
    %332 = vperm.xlu0 %331, %v273
    %v333 = vpop.permute.xlu0 %332
    %336 = vset.pattern.permute.xlu0 0
    %337 = vperm.xlu0 %336, %v274
    %v338 = vpop.permute.xlu0 %337
    %341 = vset.pattern.permute.xlu0 0
    %342 = vperm.xlu0 %341, %v275
    %v343 = vpop.permute.xlu0 %342
    %346 = vset.pattern.permute.xlu0 0
    %347 = vperm.xlu0 %346, %v276
    %v348 = vpop.permute.xlu0 %347
    %351 = vset.pattern.permute.xlu0 0
    %352 = vperm.xlu0 %351, %v277
    %v353 = vpop.permute.xlu0 %352
    %356 = vset.pattern.permute.xlu0 0
    %357 = vperm.xlu0 %356, %v278
    %v358 = vpop.permute.xlu0 %357
    %v361 = vperm.slane %v279, 0
    %v363 = vadd.f32 %v283, %v361
    %v364 = vadd.f32 %v288, %v361
    %v365 = vadd.f32 %v293, %v361
    %v366 = vadd.f32 %v298, %v361
    %v367 = vadd.f32 %v303, %v361
    %v368 = vadd.f32 %v308, %v361
    %v369 = vadd.f32 %v313, %v361
    %v370 = vadd.f32 %v318, %v361
    %v371 = vadd.f32 %v323, %v361
    %v372 = vadd.f32 %v328, %v361
    %v373 = vadd.f32 %v333, %v361
    %v374 = vadd.f32 %v338, %v361
    %v375 = vadd.f32 %v343, %v361
    %v376 = vadd.f32 %v348, %v361
    %v377 = vadd.f32 %v353, %v361
    %v378 = vadd.f32 %v358, %v361
    %v379 = vmin.f32 %v363, 0.0
    %v380 = vmin.f32 %v364, 0.0
    %v381 = vmin.f32 %v365, 0.0
    %v382 = vmin.f32 %v366, 0.0
    %v383 = vmin.f32 %v367, 0.0
    %v384 = vmin.f32 %v368, 0.0
    %v385 = vmin.f32 %v369, 0.0
    %v386 = vmin.f32 %v370, 0.0
    %v387 = vmin.f32 %v371, 0.0
    %v388 = vmin.f32 %v372, 0.0
    %v389 = vmin.f32 %v373, 0.0
    %v390 = vmin.f32 %v374, 0.0
    %v391 = vmin.f32 %v375, 0.0
    %v392 = vmin.f32 %v376, 0.0
    %v393 = vmin.f32 %v377, 0.0
    %v394 = vmin.f32 %v378, 0.0
    %v395 = vmul.f32 %v379, 1.442695
    %v396 = vpow.pop %v395
    %v397 = vmul.f32 %v380, 1.442695
    %v398 = vpow.pop %v397
    %v399 = vmul.f32 %v381, 1.442695
    %v400 = vpow.pop %v399
    %v401 = vmul.f32 %v382, 1.442695
    %v402 = vpow.pop %v401
    %v403 = vmul.f32 %v383, 1.442695
    %v404 = vpow.pop %v403
    %v405 = vmul.f32 %v384, 1.442695
    %v406 = vpow.pop %v405
    %v407 = vmul.f32 %v385, 1.442695
    %v408 = vpow.pop %v407
    %v409 = vmul.f32 %v386, 1.442695
    %v410 = vpow.pop %v409
    %v411 = vmul.f32 %v387, 1.442695
    %v412 = vpow.pop %v411
    %v413 = vmul.f32 %v388, 1.442695
    %v414 = vpow.pop %v413
    %v415 = vmul.f32 %v389, 1.442695
    %v416 = vpow.pop %v415
    %v417 = vmul.f32 %v390, 1.442695
    %v418 = vpow.pop %v417
    %v419 = vmul.f32 %v391, 1.442695
    %v420 = vpow.pop %v419
    %v421 = vmul.f32 %v392, 1.442695
    %v422 = vpow.pop %v421
    %v423 = vmul.f32 %v393, 1.442695
    %v424 = vpow.pop %v423
    %v425 = vmul.f32 %v394, 1.442695
    %v426 = vpow.pop %v425
    %vm427 = vcmp.gt.f32.partialorder %v363, 0.0
    %vm428 = vcmp.gt.f32.partialorder %v364, 0.0
    %vm429 = vcmp.gt.f32.partialorder %v365, 0.0
    %vm430 = vcmp.gt.f32.partialorder %v366, 0.0
    %vm431 = vcmp.gt.f32.partialorder %v367, 0.0
    %vm432 = vcmp.gt.f32.partialorder %v368, 0.0
    %vm433 = vcmp.gt.f32.partialorder %v369, 0.0
    %vm434 = vcmp.gt.f32.partialorder %v370, 0.0
    %vm435 = vcmp.gt.f32.partialorder %v371, 0.0
    %vm436 = vcmp.gt.f32.partialorder %v372, 0.0
    %vm437 = vcmp.gt.f32.partialorder %v373, 0.0
    %vm438 = vcmp.gt.f32.partialorder %v374, 0.0
    %vm439 = vcmp.gt.f32.partialorder %v375, 0.0
    %vm440 = vcmp.gt.f32.partialorder %v376, 0.0
    %vm441 = vcmp.gt.f32.partialorder %v377, 0.0
    %vm442 = vcmp.gt.f32.partialorder %v378, 0.0
    %v443 = vsub.f32 %v396, 1.0
    %v444 = vsub.f32 %v398, 1.0
    %v445 = vsub.f32 %v400, 1.0
    %v446 = vsub.f32 %v402, 1.0
    %v447 = vsub.f32 %v404, 1.0
    %v448 = vsub.f32 %v406, 1.0
    %v449 = vsub.f32 %v408, 1.0
    %v450 = vsub.f32 %v410, 1.0
    %v451 = vsub.f32 %v412, 1.0
    %v452 = vsub.f32 %v414, 1.0
    %v453 = vsub.f32 %v416, 1.0
    %v454 = vsub.f32 %v418, 1.0
    %v455 = vsub.f32 %v420, 1.0
    %v456 = vsub.f32 %v422, 1.0
    %v457 = vsub.f32 %v424, 1.0
    %v458 = vsub.f32 %v426, 1.0
    %v459 = vsel %vm427, %v363, %v443
    %v460 = vsel %vm428, %v364, %v444
    %v461 = vsel %vm429, %v365, %v445
    %v462 = vsel %vm430, %v366, %v446
    %v463 = vsel %vm431, %v367, %v447
    %v464 = vsel %vm432, %v368, %v448
    %v465 = vsel %vm433, %v369, %v449
    %v466 = vsel %vm434, %v370, %v450
    %v467 = vsel %vm435, %v371, %v451
    %v468 = vsel %vm436, %v372, %v452
    %v469 = vsel %vm437, %v373, %v453
    %v470 = vsel %vm438, %v374, %v454
    %v471 = vsel %vm439, %v375, %v455
    %v472 = vsel %vm440, %v376, %v456
    %v473 = vsel %vm441, %v377, %v457
    %v474 = vsel %vm442, %v378, %v458
    %s475 = smul.u32 0, 128
    %v476 = vsub.f32 0.0, %v459
    %v477 = vsub.f32 0.0, %v460
    %v478 = vsub.f32 0.0, %v461
    %v479 = vsub.f32 0.0, %v462
    %v480 = vsub.f32 0.0, %v463
    %v481 = vsub.f32 0.0, %v464
    %v482 = vsub.f32 0.0, %v465
    %v483 = vsub.f32 0.0, %v466
    %v484 = vsub.f32 0.0, %v467
    %v485 = vsub.f32 0.0, %v468
    %v486 = vsub.f32 0.0, %v469
    %v487 = vsub.f32 0.0, %v470
    %v488 = vsub.f32 0.0, %v471
    %v489 = vsub.f32 0.0, %v472
    %v490 = vsub.f32 0.0, %v473
    %v491 = vsub.f32 0.0, %v474
    %v492 = vmul.f32 %v476, 1.442695
    %v493 = vpow.pop %v492
    %v494 = vmul.f32 %v477, 1.442695
    %v495 = vpow.pop %v494
    %v496 = vmul.f32 %v478, 1.442695
    %v497 = vpow.pop %v496
    %v498 = vmul.f32 %v479, 1.442695
    %v499 = vpow.pop %v498
    %v500 = vmul.f32 %v480, 1.442695
    %v501 = vpow.pop %v500
    %v502 = vmul.f32 %v481, 1.442695
    %v503 = vpow.pop %v502
    %v504 = vmul.f32 %v482, 1.442695
    %v505 = vpow.pop %v504
    %v506 = vmul.f32 %v483, 1.442695
    %v507 = vpow.pop %v506
    %v508 = vmul.f32 %v484, 1.442695
    %v509 = vpow.pop %v508
    %v510 = vmul.f32 %v485, 1.442695
    %v511 = vpow.pop %v510
    %v512 = vmul.f32 %v486, 1.442695
    %v513 = vpow.pop %v512
    %v514 = vmul.f32 %v487, 1.442695
    %v515 = vpow.pop %v514
    %v516 = vmul.f32 %v488, 1.442695
    %v517 = vpow.pop %v516
    %v518 = vmul.f32 %v489, 1.442695
    %v519 = vpow.pop %v518
    %v520 = vmul.f32 %v490, 1.442695
    %v521 = vpow.pop %v520
    %v522 = vmul.f32 %v491, 1.442695
    %v523 = vpow.pop %v522
    %s524 = sshra.s32 %s475, 7
    %s525 = sand.u32 %s475, 127
    %s526 = scalar_lea.vmem [#allocation2], %s524
    %527 = vst [vmem:[%s526] sm:$0xff] %v493
    %528 = vst [vmem:[%s526 + $0x8] sm:$0xff] %v495
    %529 = vst [vmem:[%s526 + $0x10] sm:$0xff] %v497
    %530 = vst [vmem:[%s526 + $0x18] sm:$0xff] %v499
    %531 = vst [vmem:[%s526 + $0x20] sm:$0xff] %v501
    %532 = vst [vmem:[%s526 + $0x28] sm:$0xff] %v503
    %533 = vst [vmem:[%s526 + $0x30] sm:$0xff] %v505
    %534 = vst [vmem:[%s526 + $0x38] sm:$0xff] %v507
    %535 = vst [vmem:[%s526 + $0x40] sm:$0xff] %v509
    %536 = vst [vmem:[%s526 + $0x48] sm:$0xff] %v511
    %537 = vst [vmem:[%s526 + $0x50] sm:$0xff] %v513
    %538 = vst [vmem:[%s526 + $0x58] sm:$0xff] %v515
    %539 = vst [vmem:[%s526 + $0x60] sm:$0xff] %v517
    %540 = vst [vmem:[%s526 + $0x68] sm:$0xff] %v519
    %541 = vst [vmem:[%s526 + $0x70] sm:$0xff] %v521
    %542 = vst [vmem:[%s526 + $0x78] sm:$0xff] %v523
    // Predicated region
    $region22: #{tpu_custom_call.1} parent=1 // pred_check
      %p543 = pneg %p18
    $region23: #{tpu_custom_call.1} parent=1 // pred_check_branch
      %545 = sbr.rel (%p543) target = $region25
    $region24: #{tpu_custom_call.1} parent=1 // pred_region
      %v546 = vld [vmem:[#allocation3] sm:$0xff]
      %v547 = vld [vmem:[#allocation3 + $0x8] sm:$0xff]
      %v548 = vld [vmem:[#allocation3 + $0x10] sm:$0xff]
      %v549 = vld [vmem:[#allocation3 + $0x18] sm:$0xff]
      %v550 = vld [vmem:[#allocation3 + $0x20] sm:$0xff]
      %v551 = vld [vmem:[#allocation3 + $0x28] sm:$0xff]
      %v552 = vld [vmem:[#allocation3 + $0x30] sm:$0xff]
      %v553 = vld [vmem:[#allocation3 + $0x38] sm:$0xff]
      %v554 = vld [vmem:[#allocation3 + $0x40] sm:$0xff]
      %v555 = vld [vmem:[#allocation3 + $0x48] sm:$0xff]
      %v556 = vld [vmem:[#allocation3 + $0x50] sm:$0xff]
      %v557 = vld [vmem:[#allocation3 + $0x58] sm:$0xff]
      %v558 = vld [vmem:[#allocation3 + $0x60] sm:$0xff]
      %v559 = vld [vmem:[#allocation3 + $0x68] sm:$0xff]
      %v560 = vld [vmem:[#allocation3 + $0x70] sm:$0xff]
      %v561 = vld [vmem:[#allocation3 + $0x78] sm:$0xff]
      %vm562 = vcmp.ne.f32.partialorder %v546, 0.0
      %vm563 = vcmp.ne.f32.partialorder %v547, 0.0
      %vm564 = vcmp.ne.f32.partialorder %v548, 0.0
      %vm565 = vcmp.ne.f32.partialorder %v549, 0.0
      %vm566 = vcmp.ne.f32.partialorder %v550, 0.0
      %vm567 = vcmp.ne.f32.partialorder %v551, 0.0
      %vm568 = vcmp.ne.f32.partialorder %v552, 0.0
      %vm569 = vcmp.ne.f32.partialorder %v553, 0.0
      %vm570 = vcmp.ne.f32.partialorder %v554, 0.0
      %vm571 = vcmp.ne.f32.partialorder %v555, 0.0
      %vm572 = vcmp.ne.f32.partialorder %v556, 0.0
      %vm573 = vcmp.ne.f32.partialorder %v557, 0.0
      %vm574 = vcmp.ne.f32.partialorder %v558, 0.0
      %vm575 = vcmp.ne.f32.partialorder %v559, 0.0
      %vm576 = vcmp.ne.f32.partialorder %v560, 0.0
      %vm577 = vcmp.ne.f32.partialorder %v561, 0.0
      %v578 = vld [vmem:[#allocation2] sm:$0xff]
      %v579 = vld [vmem:[#allocation2 + $0x8] sm:$0xff]
      %v580 = vld [vmem:[#allocation2 + $0x10] sm:$0xff]
      %v581 = vld [vmem:[#allocation2 + $0x18] sm:$0xff]
      %v582 = vld [vmem:[#allocation2 + $0x20] sm:$0xff]
      %v583 = vld [vmem:[#allocation2 + $0x28] sm:$0xff]
      %v584 = vld [vmem:[#allocation2 + $0x30] sm:$0xff]
      %v585 = vld [vmem:[#allocation2 + $0x38] sm:$0xff]
      %v586 = vld [vmem:[#allocation2 + $0x40] sm:$0xff]
      %v587 = vld [vmem:[#allocation2 + $0x48] sm:$0xff]
      %v588 = vld [vmem:[#allocation2 + $0x50] sm:$0xff]
      %v589 = vld [vmem:[#allocation2 + $0x58] sm:$0xff]
      %v590 = vld [vmem:[#allocation2 + $0x60] sm:$0xff]
      %v591 = vld [vmem:[#allocation2 + $0x68] sm:$0xff]
      %v592 = vld [vmem:[#allocation2 + $0x70] sm:$0xff]
      %v593 = vld [vmem:[#allocation2 + $0x78] sm:$0xff]
      %v594 = vsel %vm562, %v578, 0.0
      %v595 = vsel %vm563, %v579, 0.0
      %v596 = vsel %vm564, %v580, 0.0
      %v597 = vsel %vm565, %v581, 0.0
      %v598 = vsel %vm566, %v582, 0.0
      %v599 = vsel %vm567, %v583, 0.0
      %v600 = vsel %vm568, %v584, 0.0
      %v601 = vsel %vm569, %v585, 0.0
      %v602 = vsel %vm570, %v586, 0.0
      %v603 = vsel %vm571, %v587, 0.0
      %v604 = vsel %vm572, %v588, 0.0
      %v605 = vsel %vm573, %v589, 0.0
      %v606 = vsel %vm574, %v590, 0.0
      %v607 = vsel %vm575, %v591, 0.0
      %v608 = vsel %vm576, %v592, 0.0
      %v609 = vsel %vm577, %v593, 0.0
      %610 = vadd.xlane.f32.xlu0 %v594
      %v611 = vpop.xlane.xlu0 %610
      %612 = vadd.xlane.f32.xlu0 %v595
      %v613 = vpop.xlane.xlu0 %612
      %614 = vadd.xlane.f32.xlu0 %v596
      %v615 = vpop.xlane.xlu0 %614
      %616 = vadd.xlane.f32.xlu0 %v597
      %v617 = vpop.xlane.xlu0 %616
      %618 = vadd.xlane.f32.xlu0 %v598
      %v619 = vpop.xlane.xlu0 %618
      %620 = vadd.xlane.f32.xlu0 %v599
      %v621 = vpop.xlane.xlu0 %620
      %622 = vadd.xlane.f32.xlu0 %v600
      %v623 = vpop.xlane.xlu0 %622
      %624 = vadd.xlane.f32.xlu0 %v601
      %v625 = vpop.xlane.xlu0 %624
      %626 = vadd.xlane.f32.xlu0 %v602
      %v627 = vpop.xlane.xlu0 %626
      %628 = vadd.xlane.f32.xlu0 %v603
      %v629 = vpop.xlane.xlu0 %628
      %630 = vadd.xlane.f32.xlu0 %v604
      %v631 = vpop.xlane.xlu0 %630
      %632 = vadd.xlane.f32.xlu0 %v605
      %v633 = vpop.xlane.xlu0 %632
      %634 = vadd.xlane.f32.xlu0 %v606
      %v635 = vpop.xlane.xlu0 %634
      %636 = vadd.xlane.f32.xlu0 %v607
      %v637 = vpop.xlane.xlu0 %636
      %638 = vadd.xlane.f32.xlu0 %v608
      %v639 = vpop.xlane.xlu0 %638
      %640 = vadd.xlane.f32.xlu0 %v609
      %v641 = vpop.xlane.xlu0 %640
      %v642 = vadd.f32 %v611, 1e-25
      %v643 = vadd.f32 %v613, 1e-25
      %v644 = vadd.f32 %v615, 1e-25
      %v645 = vadd.f32 %v617, 1e-25
      %v646 = vadd.f32 %v619, 1e-25
      %v647 = vadd.f32 %v621, 1e-25
      %v648 = vadd.f32 %v623, 1e-25
      %v649 = vadd.f32 %v625, 1e-25
      %v650 = vadd.f32 %v627, 1e-25
      %v651 = vadd.f32 %v629, 1e-25
      %v652 = vadd.f32 %v631, 1e-25
      %v653 = vadd.f32 %v633, 1e-25
      %v654 = vadd.f32 %v635, 1e-25
      %v655 = vadd.f32 %v637, 1e-25
      %v656 = vadd.f32 %v639, 1e-25
      %v657 = vadd.f32 %v641, 1e-25
      %v658 = vrcp.pop %v642
      %v659 = vmul.f32 %v642, %v658
      %v660 = vsub.f32 1.0, %v659
      %v661 = vmul.f32 %v658, %v660
      %v662 = vadd.f32 %v658, %v661
      %vm663 = vweird.f32 %v642
      %vm664 = vweird.f32 %v658
      %vm665 = vmor %vm663, %vm664
      %v666 = vsel %vm665, %v658, %v662
      %v667 = vand.u32 2147483647, %v642
      %vm668 = vcmp.eq.f32.partialorder %v667, 8.507059e+37
      %v669 = vand.u32 %v642, 2147483648
      %v670 = vor.u32 1.1754944e-38, %v669
      %v671 = vsel %vm668, %v670, %v666
      %v672 = vrcp.pop %v643
      %v673 = vmul.f32 %v643, %v672
      %v674 = vsub.f32 1.0, %v673
      %v675 = vmul.f32 %v672, %v674
      %v676 = vadd.f32 %v672, %v675
      %vm677 = vweird.f32 %v643
      %vm678 = vweird.f32 %v672
      %vm679 = vmor %vm677, %vm678
      %v680 = vsel %vm679, %v672, %v676
      %v681 = vand.u32 2147483647, %v643
      %vm682 = vcmp.eq.f32.partialorder %v681, 8.507059e+37
      %v683 = vand.u32 %v643, 2147483648
      %v684 = vor.u32 1.1754944e-38, %v683
      %v685 = vsel %vm682, %v684, %v680
      %v686 = vrcp.pop %v644
      %v687 = vmul.f32 %v644, %v686
      %v688 = vsub.f32 1.0, %v687
      %v689 = vmul.f32 %v686, %v688
      %v690 = vadd.f32 %v686, %v689
      %vm691 = vweird.f32 %v644
      %vm692 = vweird.f32 %v686
      %vm693 = vmor %vm691, %vm692
      %v694 = vsel %vm693, %v686, %v690
      %v695 = vand.u32 2147483647, %v644
      %vm696 = vcmp.eq.f32.partialorder %v695, 8.507059e+37
      %v697 = vand.u32 %v644, 2147483648
      %v698 = vor.u32 1.1754944e-38, %v697
      %v699 = vsel %vm696, %v698, %v694
      %v700 = vrcp.pop %v645
      %v701 = vmul.f32 %v645, %v700
      %v702 = vsub.f32 1.0, %v701
      %v703 = vmul.f32 %v700, %v702
      %v704 = vadd.f32 %v700, %v703
      %vm705 = vweird.f32 %v645
      %vm706 = vweird.f32 %v700
      %vm707 = vmor %vm705, %vm706
      %v708 = vsel %vm707, %v700, %v704
      %v709 = vand.u32 2147483647, %v645
      %vm710 = vcmp.eq.f32.partialorder %v709, 8.507059e+37
      %v711 = vand.u32 %v645, 2147483648
      %v712 = vor.u32 1.1754944e-38, %v711
      %v713 = vsel %vm710, %v712, %v708
      %v714 = vrcp.pop %v646
      %v715 = vmul.f32 %v646, %v714
      %v716 = vsub.f32 1.0, %v715
      %v717 = vmul.f32 %v714, %v716
      %v718 = vadd.f32 %v714, %v717
      %vm719 = vweird.f32 %v646
      %vm720 = vweird.f32 %v714
      %vm721 = vmor %vm719, %vm720
      %v722 = vsel %vm721, %v714, %v718
      %v723 = vand.u32 2147483647, %v646
      %vm724 = vcmp.eq.f32.partialorder %v723, 8.507059e+37
      %v725 = vand.u32 %v646, 2147483648
      %v726 = vor.u32 1.1754944e-38, %v725
      %v727 = vsel %vm724, %v726, %v722
      %v728 = vrcp.pop %v647
      %v729 = vmul.f32 %v647, %v728
      %v730 = vsub.f32 1.0, %v729
      %v731 = vmul.f32 %v728, %v730
      %v732 = vadd.f32 %v728, %v731
      %vm733 = vweird.f32 %v647
      %vm734 = vweird.f32 %v728
      %vm735 = vmor %vm733, %vm734
      %v736 = vsel %vm735, %v728, %v732
      %v737 = vand.u32 2147483647, %v647
      %vm738 = vcmp.eq.f32.partialorder %v737, 8.507059e+37
      %v739 = vand.u32 %v647, 2147483648
      %v740 = vor.u32 1.1754944e-38, %v739
      %v741 = vsel %vm738, %v740, %v736
      %v742 = vrcp.pop %v648
      %v743 = vmul.f32 %v648, %v742
      %v744 = vsub.f32 1.0, %v743
      %v745 = vmul.f32 %v742, %v744
      %v746 = vadd.f32 %v742, %v745
      %vm747 = vweird.f32 %v648
      %vm748 = vweird.f32 %v742
      %vm749 = vmor %vm747, %vm748
      %v750 = vsel %vm749, %v742, %v746
      %v751 = vand.u32 2147483647, %v648
      %vm752 = vcmp.eq.f32.partialorder %v751, 8.507059e+37
      %v753 = vand.u32 %v648, 2147483648
      %v754 = vor.u32 1.1754944e-38, %v753
      %v755 = vsel %vm752, %v754, %v750
      %v756 = vrcp.pop %v649
      %v757 = vmul.f32 %v649, %v756
      %v758 = vsub.f32 1.0, %v757
      %v759 = vmul.f32 %v756, %v758
      %v760 = vadd.f32 %v756, %v759
      %vm761 = vweird.f32 %v649
      %vm762 = vweird.f32 %v756
      %vm763 = vmor %vm761, %vm762
      %v764 = vsel %vm763, %v756, %v760
      %v765 = vand.u32 2147483647, %v649
      %vm766 = vcmp.eq.f32.partialorder %v765, 8.507059e+37
      %v767 = vand.u32 %v649, 2147483648
      %v768 = vor.u32 1.1754944e-38, %v767
      %v769 = vsel %vm766, %v768, %v764
      %v770 = vrcp.pop %v650
      %v771 = vmul.f32 %v650, %v770
      %v772 = vsub.f32 1.0, %v771
      %v773 = vmul.f32 %v770, %v772
      %v774 = vadd.f32 %v770, %v773
      %vm775 = vweird.f32 %v650
      %vm776 = vweird.f32 %v770
      %vm777 = vmor %vm775, %vm776
      %v778 = vsel %vm777, %v770, %v774
      %v779 = vand.u32 2147483647, %v650
      %vm780 = vcmp.eq.f32.partialorder %v779, 8.507059e+37
      %v781 = vand.u32 %v650, 2147483648
      %v782 = vor.u32 1.1754944e-38, %v781
      %v783 = vsel %vm780, %v782, %v778
      %v784 = vrcp.pop %v651
      %v785 = vmul.f32 %v651, %v784
      %v786 = vsub.f32 1.0, %v785
      %v787 = vmul.f32 %v784, %v786
      %v788 = vadd.f32 %v784, %v787
      %vm789 = vweird.f32 %v651
      %vm790 = vweird.f32 %v784
      %vm791 = vmor %vm789, %vm790
      %v792 = vsel %vm791, %v784, %v788
      %v793 = vand.u32 2147483647, %v651
      %vm794 = vcmp.eq.f32.partialorder %v793, 8.507059e+37
      %v795 = vand.u32 %v651, 2147483648
      %v796 = vor.u32 1.1754944e-38, %v795
      %v797 = vsel %vm794, %v796, %v792
      %v798 = vrcp.pop %v652
      %v799 = vmul.f32 %v652, %v798
      %v800 = vsub.f32 1.0, %v799
      %v801 = vmul.f32 %v798, %v800
      %v802 = vadd.f32 %v798, %v801
      %vm803 = vweird.f32 %v652
      %vm804 = vweird.f32 %v798
      %vm805 = vmor %vm803, %vm804
      %v806 = vsel %vm805, %v798, %v802
      %v807 = vand.u32 2147483647, %v652
      %vm808 = vcmp.eq.f32.partialorder %v807, 8.507059e+37
      %v809 = vand.u32 %v652, 2147483648
      %v810 = vor.u32 1.1754944e-38, %v809
      %v811 = vsel %vm808, %v810, %v806
      %v812 = vrcp.pop %v653
      %v813 = vmul.f32 %v653, %v812
      %v814 = vsub.f32 1.0, %v813
      %v815 = vmul.f32 %v812, %v814
      %v816 = vadd.f32 %v812, %v815
      %vm817 = vweird.f32 %v653
      %vm818 = vweird.f32 %v812
      %vm819 = vmor %vm817, %vm818
      %v820 = vsel %vm819, %v812, %v816
      %v821 = vand.u32 2147483647, %v653
      %vm822 = vcmp.eq.f32.partialorder %v821, 8.507059e+37
      %v823 = vand.u32 %v653, 2147483648
      %v824 = vor.u32 1.1754944e-38, %v823
      %v825 = vsel %vm822, %v824, %v820
      %v826 = vrcp.pop %v654
      %v827 = vmul.f32 %v654, %v826
      %v828 = vsub.f32 1.0, %v827
      %v829 = vmul.f32 %v826, %v828
      %v830 = vadd.f32 %v826, %v829
      %vm831 = vweird.f32 %v654
      %vm832 = vweird.f32 %v826
      %vm833 = vmor %vm831, %vm832
      %v834 = vsel %vm833, %v826, %v830
      %v835 = vand.u32 2147483647, %v654
      %vm836 = vcmp.eq.f32.partialorder %v835, 8.507059e+37
      %v837 = vand.u32 %v654, 2147483648
      %v838 = vor.u32 1.1754944e-38, %v837
      %v839 = vsel %vm836, %v838, %v834
      %v840 = vrcp.pop %v655
      %v841 = vmul.f32 %v655, %v840
      %v842 = vsub.f32 1.0, %v841
      %v843 = vmul.f32 %v840, %v842
      %v844 = vadd.f32 %v840, %v843
      %vm845 = vweird.f32 %v655
      %vm846 = vweird.f32 %v840
      %vm847 = vmor %vm845, %vm846
      %v848 = vsel %vm847, %v840, %v844
      %v849 = vand.u32 2147483647, %v655
      %vm850 = vcmp.eq.f32.partialorder %v849, 8.507059e+37
      %v851 = vand.u32 %v655, 2147483648
      %v852 = vor.u32 1.1754944e-38, %v851
      %v853 = vsel %vm850, %v852, %v848
      %v854 = vrcp.pop %v656
      %v855 = vmul.f32 %v656, %v854
      %v856 = vsub.f32 1.0, %v855
      %v857 = vmul.f32 %v854, %v856
      %v858 = vadd.f32 %v854, %v857
      %vm859 = vweird.f32 %v656
      %vm860 = vweird.f32 %v854
      %vm861 = vmor %vm859, %vm860
      %v862 = vsel %vm861, %v854, %v858
      %v863 = vand.u32 2147483647, %v656
      %vm864 = vcmp.eq.f32.partialorder %v863, 8.507059e+37
      %v865 = vand.u32 %v656, 2147483648
      %v866 = vor.u32 1.1754944e-38, %v865
      %v867 = vsel %vm864, %v866, %v862
      %v868 = vrcp.pop %v657
      %v869 = vmul.f32 %v657, %v868
      %v870 = vsub.f32 1.0, %v869
      %v871 = vmul.f32 %v868, %v870
      %v872 = vadd.f32 %v868, %v871
      %vm873 = vweird.f32 %v657
      %vm874 = vweird.f32 %v868
      %vm875 = vmor %vm873, %vm874
      %v876 = vsel %vm875, %v868, %v872
      %v877 = vand.u32 2147483647, %v657
      %vm878 = vcmp.eq.f32.partialorder %v877, 8.507059e+37
      %v879 = vand.u32 %v657, 2147483648
      %v880 = vor.u32 1.1754944e-38, %v879
      %v881 = vsel %vm878, %v880, %v876
      %v882 = vmul.f32 %v594, %v671
      %v883 = vmul.f32 %v595, %v685
      %v884 = vmul.f32 %v596, %v699
      %v885 = vmul.f32 %v597, %v713
      %v886 = vmul.f32 %v598, %v727
      %v887 = vmul.f32 %v599, %v741
      %v888 = vmul.f32 %v600, %v755
      %v889 = vmul.f32 %v601, %v769
      %v890 = vmul.f32 %v602, %v783
      %v891 = vmul.f32 %v603, %v797
      %v892 = vmul.f32 %v604, %v811
      %v893 = vmul.f32 %v605, %v825
      %v894 = vmul.f32 %v606, %v839
      %v895 = vmul.f32 %v607, %v853
      %v896 = vmul.f32 %v608, %v867
      %v897 = vmul.f32 %v609, %v881
      %898 = vst [vmem:[#allocation3] sm:$0xff] %v882
      %899 = vst [vmem:[#allocation3 + $0x8] sm:$0xff] %v883
      %900 = vst [vmem:[#allocation3 + $0x10] sm:$0xff] %v884
      %901 = vst [vmem:[#allocation3 + $0x18] sm:$0xff] %v885
      %902 = vst [vmem:[#allocation3 + $0x20] sm:$0xff] %v886
      %903 = vst [vmem:[#allocation3 + $0x28] sm:$0xff] %v887
      %904 = vst [vmem:[#allocation3 + $0x30] sm:$0xff] %v888
      %905 = vst [vmem:[#allocation3 + $0x38] sm:$0xff] %v889
      %906 = vst [vmem:[#allocation3 + $0x40] sm:$0xff] %v890
      %907 = vst [vmem:[#allocation3 + $0x48] sm:$0xff] %v891
      %908 = vst [vmem:[#allocation3 + $0x50] sm:$0xff] %v892
      %909 = vst [vmem:[#allocation3 + $0x58] sm:$0xff] %v893
      %910 = vst [vmem:[#allocation3 + $0x60] sm:$0xff] %v894
      %911 = vst [vmem:[#allocation3 + $0x68] sm:$0xff] %v895
      %912 = vst [vmem:[#allocation3 + $0x70] sm:$0xff] %v896
      %913 = vst [vmem:[#allocation3 + $0x78] sm:$0xff] %v897
    $region25: #{tpu_custom_call.1} parent=1 // pred_fallthru
      _
    // Predicated region
    $region26: #{tpu_custom_call.1} parent=1 // pred_check
      _
    $region27: #{tpu_custom_call.1} parent=1 // pred_check_branch
      %915 = sbr.rel (0) target = $region29
    $region28: #{tpu_custom_call.1} parent=1 // pred_region
      %917 = vsyncadd [#allocation4], 0
      %s918 = sshll.u32 [#allocation3], 4
      %s919 = int_to_ptr.vmem [resolvable:$true] %s918
      %s920 = sshll.u32 %s4, 4
      %s921 = int_to_ptr.hbm [resolvable:$true] %s920
      %926 = dma.vmem_to_hbm [thread:$0]  %s919, 2048, %s921, [#allocation4], 128, 128, 8
    $region29: #{tpu_custom_call.1} parent=1 // pred_fallthru
      _
    // Predicated region
    $region30: #{tpu_custom_call.1} parent=1 // pred_check
      _
    $region31: #{tpu_custom_call.1} parent=1 // pred_check_branch
      %928 = sbr.rel (0) target = $region33
    $region32: #{tpu_custom_call.1} parent=1 // pred_region
      %930 = dma.done [#allocation4], 2048
    $region33: #{tpu_custom_call.1} parent=1 // pred_fallthru
      _
    %931 = vsyncpa [#allocation4], 1

</llo_original>
